<compile_context>
chip_gen: v7x
topology: tpu7x:2x2x1
jax: 0.10.0
libtpu: 0.0.40
codegen_flags: <defaults>
</compile_context>

<pallas_src>
import jax
import jax.numpy as jnp
from jax.experimental import pallas as pl
from jax.experimental.pallas import tpu as pltpu

_LANE = 128
_TARGET_BLOCK_BYTES = 4 * 1024 * 1024  # ~4 MiB per block -> ~16 MiB pipelined


def _identity_copy_kernel(x_ref, o_ref):
    # Pure copy of the current VMEM tile.
    o_ref[...] = x_ref[...]


def _sublane_multiple(dtype) -> int:
    itemsize = jnp.dtype(dtype).itemsize
    return {4: 8, 2: 16, 1: 32}.get(itemsize, 8)


def identity_forward(x: jax.Array, *, alias_input_output: bool = False) -> jax.Array:
    """Pallas identity: returns a tensor equal to x (same shape, same dtype).

    alias_input_output=True adds input_output_aliases={0: 0}; only use it when
    the caller can donate x (it removes the separate output allocation).
    """
    orig_shape = x.shape
    dtype = x.dtype
    n = x.size
    if n == 0:
        return x

    itemsize = jnp.dtype(dtype).itemsize
    sub = _sublane_multiple(dtype)

    # Present a lane-dense (rows, 128) slab to the kernel when possible so the
    # output last dim is a multiple of 128 (unmasked stores).  Otherwise fall
    # back to (rows, last_dim) with the full last dim as the block width.
    if n % _LANE == 0:
        cols = _LANE
    else:
        cols = orig_shape[-1] if x.ndim >= 1 else 1
    rows = n // cols
    x2 = x.reshape(rows, cols)

    # Pick the number of rows per block: ~4 MiB, rounded to the dtype's native
    # sublane multiple, clamped to the full row extent.
    rows_target = max(sub, (_TARGET_BLOCK_BYTES // (cols * itemsize)) // sub * sub)
    tb = min(rows_target, rows)  # tb == rows (full dim) or a multiple of `sub`

    grid = (pl.cdiv(rows, tb),)
    block_bytes = tb * cols * itemsize
    # 2 operands x 2 pipeline buffers, plus headroom; bounded for v7x (64 MiB).
    vmem_limit = int(min(48 * 1024 * 1024,
                         max(16 * 1024 * 1024, 4 * block_bytes + 2 * 1024 * 1024)))

    cost = pl.CostEstimate(flops=0, transcendentals=0,
                           bytes_accessed=2 * n * itemsize)

    y2 = pl.pallas_call(
        _identity_copy_kernel,
        out_shape=jax.ShapeDtypeStruct((rows, cols), dtype),
        grid_spec=pltpu.PrefetchScalarGridSpec(
            num_scalar_prefetch=0,
            grid=grid,
            in_specs=[pl.BlockSpec((tb, cols), lambda i: (i, 0))],
            out_specs=pl.BlockSpec((tb, cols), lambda i: (i, 0)),
        ),
        compiler_params=pltpu.CompilerParams(
            dimension_semantics=("parallel",),
            vmem_limit_bytes=vmem_limit,
        ),
        cost_estimate=cost,
        input_output_aliases=({0: 0} if alias_input_output else {}),
    )(x2)
    return y2.reshape(orig_shape)


class IdentityPallas:
    """Mirror of the PyTorch Identity module (no parameters)."""

    def __init__(self, d: int):
        self.in_features = d
        self.out_features = d

    def __call__(self, x: jax.Array) -> jax.Array:
        return identity_forward(x)


if __name__ == "__main__":
    key = jax.random.PRNGKey(0)

    # Primary (matches the module spec shape: (batch, d) feature matrix).
    batch, d = 8, 32
    x = jax.random.normal(key, (batch, d), dtype=jnp.float32)
    mod = IdentityPallas(d)
    y = jax.block_until_ready(mod(x))
    assert y.shape == x.shape and y.dtype == x.dtype
    assert bool(jnp.all(y == x))

    # Small bf16 check to exercise the dtype-aware (16-row) sublane path.
    xb = jax.random.normal(jax.random.PRNGKey(1), (16, 256), dtype=jnp.bfloat16)
    yb = jax.block_until_ready(identity_forward(xb))
    assert yb.shape == xb.shape and yb.dtype == xb.dtype
    assert bool(jnp.all(yb == xb))

    print("KERNEL_OK")
</pallas_src>

<mosaic_0001>
module attributes {stable_mosaic.version = 11 : i64} {
  func.func @_identity_copy_kernel(%arg0: i32, %arg1: memref<2x128xf32, #tpu.memory_space<vmem>>, %arg2: memref<2x128xf32, #tpu.memory_space<vmem>>) attributes {dimension_semantics = [#tpu.dimension_semantics<parallel>], iteration_bounds = array<i64: 1>, scalar_prefetch = 0 : i64, scratch_operands = 0 : i64, tpu.core_type = #tpu.core_type<tc>, window_params = [{transform_indices = @transform_0, window_bounds = array<i64: 2, 128>}, {transform_indices = @transform_1, window_bounds = array<i64: 2, 128>}]} {
    %c0 = arith.constant 0 : index
    %c0_0 = arith.constant 0 : index
    %0 = vector.load %arg1[%c0, %c0_0] : memref<2x128xf32, #tpu.memory_space<vmem>>, vector<2x128xf32>
    %c0_1 = arith.constant 0 : index
    %c0_2 = arith.constant 0 : index
    %1 = vector.load %arg2[%c0_1, %c0_2] : memref<2x128xf32, #tpu.memory_space<vmem>>, vector<2x128xf32>
    tpu.vector_store %arg2[%c0_1, %c0_2], %0 {strides = array<i32>} : memref<2x128xf32, #tpu.memory_space<vmem>>, vector<2x128xf32>,
    return
  }
  func.func @transform_0(%arg0: i32) -> (i32, i32) {
    %c0_i32 = arith.constant 0 : i32
    %c0_i32_0 = arith.constant 0 : i32
    return %arg0, %c0_i32 : i32, i32
  }
  func.func @transform_1(%arg0: i32) -> (i32, i32) {
    %c0_i32 = arith.constant 0 : i32
    %c0_i32_0 = arith.constant 0 : i32
    return %arg0, %c0_i32 : i32, i32
  }
}

</mosaic_0001>

<llo_original>
// kernel: tpu_custom_call.1
$region0: #{tpu_custom_call.1}
  #allocation0 [shape = 'u32[]', space=smem, size = 0x4, offset = 0x4, fixed_abs, tag = 'smem constant byte address 0x4 - core index']
  #allocation1 [shape = 'u32[144,128]{1,0:T(1,128)}', space=vmem, size = 0x12000, scoped, tag = 'internal scratch']
  %s0 = inlined_call_operand.hbm [shape: f32[2,128], index: 0, kind: input, shape index: {}]
  %s1 = inlined_call_operand.hbm [shape: f32[2,128], index: 1, kind: output, shape index: {}]
  %s2 = sld [smem:[#allocation0]]
  $region18: #{tpu_custom_call.1} parent=0
    _
  %s4 = ssub.s32 1, %s2
  %s5 = scalar_select 0, %s4, %s2
  $region1: #{tpu_custom_call.1} parent=0
    #allocation2 [shape = 'u8[1024]{0}', space=vmem, size = 0x400, scoped, tag = 'input window, operand 0, single buffered']
    #allocation3 [shape = 's32[1]{0}', space=sflag, size = 0x4, scoped, tag = 'scoped memory for tpu_custom_call.1']
    #allocation4 [shape = 's32[1]{0}', space=sflag, size = 0x4, scoped, tag = 'scoped memory for tpu_custom_call.1']
    #allocation5 [shape = 'u8[1024]{0}', space=vmem, size = 0x400, scoped, tag = 'output window, operand 0, single buffered']
    %6 = vsyncpa [#allocation3], 0
    %7 = vsyncpa [#allocation4], 0
    // Predicated region
    $region2: #{tpu_custom_call.1} parent=1 // pred_check
      _
    $region3: #{tpu_custom_call.1} parent=1 // pred_check_branch
      %9 = sbr.rel (0) target = $region5
    $region4: #{tpu_custom_call.1} parent=1 // pred_region
      %s11 = ssub.s32 32, 32
      %12 = vsyncadd [#allocation3], %s11
      %s14 = sshll.u32 [#allocation2], 4
      %s15 = int_to_ptr.vmem [resolvable:$true] %s14
      %17 = dma.hbm_to_vmem [thread:$0]  %s0, 32, %s15, [#allocation3]
    $region5: #{tpu_custom_call.1} parent=1 // pred_fallthru
      _
    // Predicated region
    $region6: #{tpu_custom_call.1} parent=1 // pred_check
      _
    $region7: #{tpu_custom_call.1} parent=1 // pred_check_branch
      %19 = sbr.rel (0) target = $region9
    $region8: #{tpu_custom_call.1} parent=1 // pred_region
      %20 = dma.done [#allocation3], 32
    $region9: #{tpu_custom_call.1} parent=1 // pred_fallthru
      _
    %v21 = vld [vmem:[#allocation2] sm:$0x3]
    %22 = vst [vmem:[#allocation5] sm:$0x3] %v21
    // Predicated region
    $region10: #{tpu_custom_call.1} parent=1 // pred_check
      _
    $region11: #{tpu_custom_call.1} parent=1 // pred_check_branch
      %24 = sbr.rel (0) target = $region13
    $region12: #{tpu_custom_call.1} parent=1 // pred_region
      %s26 = ssub.s32 32, 32
      %27 = vsyncadd [#allocation4], %s26
      %s29 = sshll.u32 [#allocation5], 4
      %s30 = int_to_ptr.vmem [resolvable:$true] %s29
      %32 = dma.vmem_to_hbm [thread:$0]  %s30, 32, %s1, [#allocation4]
    $region13: #{tpu_custom_call.1} parent=1 // pred_fallthru
      _
    // Predicated region
    $region14: #{tpu_custom_call.1} parent=1 // pred_check
      _
    $region15: #{tpu_custom_call.1} parent=1 // pred_check_branch
      %34 = sbr.rel (0) target = $region17
    $region16: #{tpu_custom_call.1} parent=1 // pred_region
      %35 = dma.done [#allocation4], 32
    $region17: #{tpu_custom_call.1} parent=1 // pred_fallthru
      _
    %36 = vsyncpa [#allocation3], 1
    %37 = vsyncpa [#allocation4], 1

</llo_original>
